<compile_context>
chip_gen: v5e
topology: v5e:2x2
jax: 0.10.0
libtpu: 0.0.40
codegen_flags: <defaults>
</compile_context>

<pallas_src>
import functools

import jax
import jax.numpy as jnp
from jax import lax
from jax.experimental import pallas as pl
from jax.experimental.pallas import tpu as pltpu


def _mha_kernel(x_ref, wqkv_ref, wo_ref, bo_ref, mask_ref, o_ref, *,
                num_heads, head_dim, scale):
    d_out = num_heads * head_dim

    x = x_ref[0]            # (T, d_in)        bf16
    wqkv = wqkv_ref[...]    # (d_in, 3*d_out)  bf16
    wo = wo_ref[...]        # (d_out, d_out)   f32
    mask = mask_ref[...]    # (T, T)           f32 additive mask (0 / -inf)

    # Fused Q/K/V projection for all heads: one bf16 MXU matmul, f32 accumulate.
    qkv = jnp.dot(x, wqkv, preferred_element_type=jnp.float32)   # (T, 3*d_out)

    q_all = qkv[:, 0:d_out] * scale            # fold 1/sqrt(head_dim) into Q once
    k_all = qkv[:, d_out:2 * d_out]
    v_all = qkv[:, 2 * d_out:3 * d_out]

    contract_last = (((1,), (1,)), ((), ()))   # contract last dims: no K transpose

    T = x.shape[0]
    out = jnp.zeros((T, d_out), jnp.float32)

    # Heads fused into this single grid step; statically unrolled (H is small).
    for h in range(num_heads):
        lo = h * head_dim
        hi = lo + head_dim
        q = q_all[:, lo:hi]                    # (T, hd) f32
        k = k_all[:, lo:hi]
        v = v_all[:, lo:hi]

        scores = lax.dot_general(q, k, contract_last,
                                 preferred_element_type=jnp.float32)  # (T, T)
        scores = scores + mask                 # additive causal mask (diag masked)

        # f32 softmax; fully-masked rows -> NaN, matching the torch module.
        m = jnp.max(scores, axis=-1, keepdims=True)
        e = jnp.exp(scores - m)
        denom = jnp.sum(e, axis=-1, keepdims=True)
        p = e * pl.reciprocal(denom, approx=True)    # divide on EUP, stays f32

        ctx = jnp.dot(p, v, preferred_element_type=jnp.float32)       # (T, hd)

        # Fuse the head-concat into the output projection: accumulate this
        # head's contribution through its row-slice of Wo.
        out = out + jnp.dot(ctx, wo[lo:hi, :],
                            preferred_element_type=jnp.float32)       # (T, d_out)

    # Single lane-contiguous store per batch step (d_out lanes), bias folded in.
    o_ref[0] = (out + bo_ref[...]).astype(o_ref.dtype)


def multi_head_attention(x, wq_t, wk_t, wv_t, wo_t, bo, *, num_heads):
    """x: (B, T, d_in); w*_t: (in, out) pre-transposed nn.Linear weights; bo: (1, d_out)."""
    B, T, d_in = x.shape
    d_out = wq_t.shape[1]
    head_dim = d_out // num_heads
    scale = 1.0 / (head_dim ** 0.5)

    # Pack Q/K/V weights into a single (d_in, 3*d_out) bf16 slab: one DMA,
    # one dense projection matmul in-kernel.
    wqkv = jnp.concatenate([wq_t, wk_t, wv_t], axis=1).astype(jnp.bfloat16)
    x_bf = x.astype(jnp.bfloat16)
    wo = wo_t.astype(jnp.float32)
    bo = bo.astype(jnp.float32).reshape(1, d_out)

    # Precomputed additive causal mask (torch.triu(..., diagonal=0) semantics:
    # the diagonal is ALSO masked).
    mask = jnp.where(jnp.triu(jnp.ones((T, T), dtype=bool), k=0),
                     jnp.float32(-jnp.inf), jnp.float32(0.0))

    kernel = functools.partial(_mha_kernel, num_heads=num_heads,
                               head_dim=head_dim, scale=scale)

    return pl.pallas_call(
        kernel,
        out_shape=jax.ShapeDtypeStruct((B, T, d_out), x.dtype),
        grid_spec=pltpu.PrefetchScalarGridSpec(
            num_scalar_prefetch=0,
            grid=(B,),
            in_specs=[
                pl.BlockSpec((1, T, d_in), lambda b: (b, 0, 0)),        # x[b]
                pl.BlockSpec((d_in, 3 * d_out), lambda b: (0, 0)),      # Wqkv (invariant)
                pl.BlockSpec((d_out, d_out), lambda b: (0, 0)),         # Wo   (invariant)
                pl.BlockSpec((1, d_out), lambda b: (0, 0)),             # bias (invariant)
                pl.BlockSpec((T, T), lambda b: (0, 0)),                 # mask (invariant)
            ],
            out_specs=pl.BlockSpec((1, T, d_out), lambda b: (b, 0, 0)),
        ),
        compiler_params=pltpu.CompilerParams(
            # B axis parallel -> both v7x TensorCores get work; no reduction axis.
            dimension_semantics=("parallel",),
            # Floor, not cap: plenty for these shapes on v5e/v6e/v7x; raise
            # when T / batch tiles grow (keep <= ~48 MiB on v7x).
            vmem_limit_bytes=32 * 1024 * 1024,
        ),
    )(x_bf, wqkv, wo, bo, mask)


def _reference(x, wq_t, wk_t, wv_t, wo_t, bo, *, num_heads):
    B, T, d_in = x.shape
    d_out = wq_t.shape[1]
    hd = d_out // num_heads
    q = (x @ wq_t).reshape(B, T, num_heads, hd).transpose(0, 2, 1, 3)
    k = (x @ wk_t).reshape(B, T, num_heads, hd).transpose(0, 2, 1, 3)
    v = (x @ wv_t).reshape(B, T, num_heads, hd).transpose(0, 2, 1, 3)
    s = jnp.einsum("bhqd,bhkd->bhqk", q, k)
    mask = jnp.triu(jnp.ones((T, T), dtype=bool))
    s = jnp.where(mask, -jnp.inf, s)
    w = jax.nn.softmax(s / hd ** 0.5, axis=-1)
    ctx = jnp.einsum("bhqk,bhkd->bhqd", w, v).transpose(0, 2, 1, 3).reshape(B, T, d_out)
    return ctx @ wo_t + bo


if __name__ == "__main__":
    # Small shapes consistent with the module: b=2, seq=8, d_in=32, d_out=32, heads=2.
    B, T, D_IN, D_OUT, NUM_HEADS = 2, 8, 32, 32, 2

    key = jax.random.PRNGKey(0)
    kx, kq, kk, kv, ko, kb = jax.random.split(key, 6)

    x = jax.random.normal(kx, (B, T, D_IN), dtype=jnp.float32)
    # nn.Linear weights, stored pre-transposed as (in_features, out_features).
    wq_t = jax.random.normal(kq, (D_IN, D_OUT), dtype=jnp.float32) * 0.05
    wk_t = jax.random.normal(kk, (D_IN, D_OUT), dtype=jnp.float32) * 0.05
    wv_t = jax.random.normal(kv, (D_IN, D_OUT), dtype=jnp.float32) * 0.05
    wo_t = jax.random.normal(ko, (D_OUT, D_OUT), dtype=jnp.float32) * 0.05
    bo = jax.random.normal(kb, (1, D_OUT), dtype=jnp.float32) * 0.05

    out = multi_head_attention(x, wq_t, wk_t, wv_t, wo_t, bo, num_heads=NUM_HEADS)
    out = jax.block_until_ready(out)

    ref = _reference(x, wq_t, wk_t, wv_t, wo_t, bo, num_heads=NUM_HEADS)
    # Row 0 is fully masked by torch.triu(diagonal=0) -> NaN in both implementations.
    # Only the QKV projection uses bf16 operands; everything else is f32.
    assert out.shape == (B, T, D_OUT)
    assert bool(jnp.allclose(out, ref, atol=2e-2, rtol=2e-2, equal_nan=True))

    print("KERNEL_OK")
</pallas_src>

<mosaic_0001>
module attributes {stable_mosaic.version = 11 : i64} {
  func.func @_mha_kernel(%arg0: i32, %arg1: memref<1x8x32xbf16, #tpu.memory_space<vmem>>, %arg2: memref<32x96xbf16, #tpu.memory_space<vmem>>, %arg3: memref<32x32xf32, #tpu.memory_space<vmem>>, %arg4: memref<1x32xf32, #tpu.memory_space<vmem>>, %arg5: memref<8x8xf32, #tpu.memory_space<vmem>>, %arg6: memref<1x8x32xf32, #tpu.memory_space<vmem>>) attributes {dimension_semantics = [#tpu.dimension_semantics<parallel>], iteration_bounds = array<i64: 2>, scalar_prefetch = 0 : i64, scratch_operands = 0 : i64, tpu.core_type = #tpu.core_type<tc>, window_params = [{transform_indices = @transform_0, window_bounds = array<i64: 1, 8, 32>}, {pipeline_mode = #tpu.pipeline_mode<synchronous>, transform_indices = @transform_1, window_bounds = array<i64: 32, 96>}, {pipeline_mode = #tpu.pipeline_mode<synchronous>, transform_indices = @transform_2, window_bounds = array<i64: 32, 32>}, {pipeline_mode = #tpu.pipeline_mode<synchronous>, transform_indices = @transform_3, window_bounds = array<i64: 1, 32>}, {pipeline_mode = #tpu.pipeline_mode<synchronous>, transform_indices = @transform_4, window_bounds = array<i64: 8, 8>}, {transform_indices = @transform_5, window_bounds = array<i64: 1, 8, 32>}]} {
    %c0 = arith.constant 0 : index
    %c0_0 = arith.constant 0 : index
    %c0_1 = arith.constant 0 : index
    %0 = vector.load %arg1[%c0, %c0_0, %c0_1] : memref<1x8x32xbf16, #tpu.memory_space<vmem>>, vector<1x8x32xbf16>
    %1 = vector.shape_cast %0 : vector<1x8x32xbf16> to vector<8x32xbf16>
    %c0_2 = arith.constant 0 : index
    %c0_3 = arith.constant 0 : index
    %2 = vector.load %arg2[%c0_2, %c0_3] : memref<32x96xbf16, #tpu.memory_space<vmem>>, vector<32x96xbf16>
    %c0_4 = arith.constant 0 : index
    %c0_5 = arith.constant 0 : index
    %3 = vector.load %arg3[%c0_4, %c0_5] : memref<32x32xf32, #tpu.memory_space<vmem>>, vector<32x32xf32>
    %c0_6 = arith.constant 0 : index
    %c0_7 = arith.constant 0 : index
    %4 = vector.load %arg5[%c0_6, %c0_7] : memref<8x8xf32, #tpu.memory_space<vmem>>, vector<8x8xf32>
    %cst = arith.constant dense<0.000000e+00> : vector<8x96xf32>
    %5 = tpu.matmul %1, %2, %cst {dimension_numbers = #tpu.dot_dimension_numbers<[1], [0], [0], [1], [0, 0, 1, 1], [], []>} : vector<8x32xbf16>, vector<32x96xbf16>, vector<8x96xf32> -> vector<8x96xf32>
    %6 = vector.extract_strided_slice %5 {offsets = [0, 0], sizes = [8, 32], strides = [1, 1]} : vector<8x96xf32> to vector<8x32xf32>
    %cst_8 = arith.constant 2.500000e-01 : f32
    %7 = vector.broadcast %cst_8 : f32 to vector<8x32xf32>
    %8 = arith.mulf %6, %7 : vector<8x32xf32>
    %9 = vector.extract_strided_slice %5 {offsets = [0, 32], sizes = [8, 32], strides = [1, 1]} : vector<8x96xf32> to vector<8x32xf32>
    %10 = vector.extract_strided_slice %5 {offsets = [0, 64], sizes = [8, 32], strides = [1, 1]} : vector<8x96xf32> to vector<8x32xf32>
    %cst_9 = arith.constant 0.000000e+00 : f32
    %11 = vector.broadcast %cst_9 : f32 to vector<8x32xf32>
    %12 = vector.extract_strided_slice %8 {offsets = [0, 0], sizes = [8, 16], strides = [1, 1]} : vector<8x32xf32> to vector<8x16xf32>
    %13 = vector.extract_strided_slice %9 {offsets = [0, 0], sizes = [8, 16], strides = [1, 1]} : vector<8x32xf32> to vector<8x16xf32>
    %14 = vector.extract_strided_slice %10 {offsets = [0, 0], sizes = [8, 16], strides = [1, 1]} : vector<8x32xf32> to vector<8x16xf32>
    %cst_10 = arith.constant dense<0.000000e+00> : vector<8x8xf32>
    %15 = tpu.matmul %12, %13, %cst_10 {dimension_numbers = #tpu.dot_dimension_numbers<[1], [1], [0], [0], [0, 0, 1, 0], [], []>} : vector<8x16xf32>, vector<8x16xf32>, vector<8x8xf32> -> vector<8x8xf32>
    %16 = arith.addf %15, %4 : vector<8x8xf32>
    %cst_11 = arith.constant dense<0xFF800000> : vector<8xf32>
    %17 = vector.multi_reduction <maximumf>, %16, %cst_11 [1] : vector<8x8xf32> to vector<8xf32>
    %18 = vector.shape_cast %17 : vector<8xf32> to vector<8x1xf32>
    %19 = vector.broadcast %18 : vector<8x1xf32> to vector<8x8xf32>
    %20 = arith.subf %16, %19 : vector<8x8xf32>
    %21 = math.exp %20 : vector<8x8xf32>
    %cst_12 = arith.constant dense<0.000000e+00> : vector<8xf32>
    %22 = vector.multi_reduction <add>, %21, %cst_12 [1] : vector<8x8xf32> to vector<8xf32>
    %23 = vector.shape_cast %22 : vector<8xf32> to vector<8x1xf32>
    %24 = tpu.reciprocal %23 {approx = true} : vector<8x1xf32> -> vector<8x1xf32>
    %25 = vector.broadcast %24 : vector<8x1xf32> to vector<8x8xf32>
    %26 = arith.mulf %21, %25 : vector<8x8xf32>
    %cst_13 = arith.constant dense<0.000000e+00> : vector<8x16xf32>
    %27 = tpu.matmul %26, %14, %cst_13 {dimension_numbers = #tpu.dot_dimension_numbers<[1], [0], [0], [1], [0, 0, 1, 1], [], []>} : vector<8x8xf32>, vector<8x16xf32>, vector<8x16xf32> -> vector<8x16xf32>
    %28 = vector.extract_strided_slice %3 {offsets = [0, 0], sizes = [16, 32], strides = [1, 1]} : vector<32x32xf32> to vector<16x32xf32>
    %cst_14 = arith.constant dense<0.000000e+00> : vector<8x32xf32>
    %29 = tpu.matmul %27, %28, %cst_14 {dimension_numbers = #tpu.dot_dimension_numbers<[1], [0], [0], [1], [0, 0, 1, 1], [], []>} : vector<8x16xf32>, vector<16x32xf32>, vector<8x32xf32> -> vector<8x32xf32>
    %30 = arith.addf %11, %29 : vector<8x32xf32>
    %31 = vector.extract_strided_slice %8 {offsets = [0, 16], sizes = [8, 16], strides = [1, 1]} : vector<8x32xf32> to vector<8x16xf32>
    %32 = vector.extract_strided_slice %9 {offsets = [0, 16], sizes = [8, 16], strides = [1, 1]} : vector<8x32xf32> to vector<8x16xf32>
    %33 = vector.extract_strided_slice %10 {offsets = [0, 16], sizes = [8, 16], strides = [1, 1]} : vector<8x32xf32> to vector<8x16xf32>
    %cst_15 = arith.constant dense<0.000000e+00> : vector<8x8xf32>
    %34 = tpu.matmul %31, %32, %cst_15 {dimension_numbers = #tpu.dot_dimension_numbers<[1], [1], [0], [0], [0, 0, 1, 0], [], []>} : vector<8x16xf32>, vector<8x16xf32>, vector<8x8xf32> -> vector<8x8xf32>
    %35 = arith.addf %34, %4 : vector<8x8xf32>
    %cst_16 = arith.constant dense<0xFF800000> : vector<8xf32>
    %36 = vector.multi_reduction <maximumf>, %35, %cst_16 [1] : vector<8x8xf32> to vector<8xf32>
    %37 = vector.shape_cast %36 : vector<8xf32> to vector<8x1xf32>
    %38 = vector.broadcast %37 : vector<8x1xf32> to vector<8x8xf32>
    %39 = arith.subf %35, %38 : vector<8x8xf32>
    %40 = math.exp %39 : vector<8x8xf32>
    %cst_17 = arith.constant dense<0.000000e+00> : vector<8xf32>
    %41 = vector.multi_reduction <add>, %40, %cst_17 [1] : vector<8x8xf32> to vector<8xf32>
    %42 = vector.shape_cast %41 : vector<8xf32> to vector<8x1xf32>
    %43 = tpu.reciprocal %42 {approx = true} : vector<8x1xf32> -> vector<8x1xf32>
    %44 = vector.broadcast %43 : vector<8x1xf32> to vector<8x8xf32>
    %45 = arith.mulf %40, %44 : vector<8x8xf32>
    %cst_18 = arith.constant dense<0.000000e+00> : vector<8x16xf32>
    %46 = tpu.matmul %45, %33, %cst_18 {dimension_numbers = #tpu.dot_dimension_numbers<[1], [0], [0], [1], [0, 0, 1, 1], [], []>} : vector<8x8xf32>, vector<8x16xf32>, vector<8x16xf32> -> vector<8x16xf32>
    %47 = vector.extract_strided_slice %3 {offsets = [16, 0], sizes = [16, 32], strides = [1, 1]} : vector<32x32xf32> to vector<16x32xf32>
    %cst_19 = arith.constant dense<0.000000e+00> : vector<8x32xf32>
    %48 = tpu.matmul %46, %47, %cst_19 {dimension_numbers = #tpu.dot_dimension_numbers<[1], [0], [0], [1], [0, 0, 1, 1], [], []>} : vector<8x16xf32>, vector<16x32xf32>, vector<8x32xf32> -> vector<8x32xf32>
    %49 = arith.addf %30, %48 : vector<8x32xf32>
    %c0_20 = arith.constant 0 : index
    %c0_21 = arith.constant 0 : index
    %50 = vector.load %arg4[%c0_20, %c0_21] : memref<1x32xf32, #tpu.memory_space<vmem>>, vector<1x32xf32>
    %51 = vector.broadcast %50 : vector<1x32xf32> to vector<8x32xf32>
    %52 = arith.addf %49, %51 : vector<8x32xf32>
    %c0_22 = arith.constant 0 : index
    %c0_23 = arith.constant 0 : index
    %c0_24 = arith.constant 0 : index
    %53 = vector.load %arg6[%c0_22, %c0_23, %c0_24] : memref<1x8x32xf32, #tpu.memory_space<vmem>>, vector<1x8x32xf32>
    %54 = vector.shape_cast %53 : vector<1x8x32xf32> to vector<8x32xf32>
    %55 = vector.shape_cast %52 : vector<8x32xf32> to vector<1x8x32xf32>
    tpu.vector_store %arg6[%c0_22, %c0_23, %c0_24], %55 {strides = array<i32>} : memref<1x8x32xf32, #tpu.memory_space<vmem>>, vector<1x8x32xf32>,
    return
  }
  func.func @transform_0(%arg0: i32) -> (i32, i32, i32) {
    %c0_i32 = arith.constant 0 : i32
    %c0_i32_0 = arith.constant 0 : i32
    %c0_i32_1 = arith.constant 0 : i32
    return %arg0, %c0_i32, %c0_i32_0 : i32, i32, i32
  }
  func.func @transform_1(%arg0: i32) -> (i32, i32) {
    %c0_i32 = arith.constant 0 : i32
    %c0_i32_0 = arith.constant 0 : i32
    %c0_i32_1 = arith.constant 0 : i32
    return %c0_i32, %c0_i32_0 : i32, i32
  }
  func.func @transform_2(%arg0: i32) -> (i32, i32) {
    %c0_i32 = arith.constant 0 : i32
    %c0_i32_0 = arith.constant 0 : i32
    %c0_i32_1 = arith.constant 0 : i32
    return %c0_i32, %c0_i32_0 : i32, i32
  }
  func.func @transform_3(%arg0: i32) -> (i32, i32) {
    %c0_i32 = arith.constant 0 : i32
    %c0_i32_0 = arith.constant 0 : i32
    %c0_i32_1 = arith.constant 0 : i32
    return %c0_i32, %c0_i32_0 : i32, i32
  }
  func.func @transform_4(%arg0: i32) -> (i32, i32) {
    %c0_i32 = arith.constant 0 : i32
    %c0_i32_0 = arith.constant 0 : i32
    %c0_i32_1 = arith.constant 0 : i32
    return %c0_i32, %c0_i32_0 : i32, i32
  }
  func.func @transform_5(%arg0: i32) -> (i32, i32, i32) {
    %c0_i32 = arith.constant 0 : i32
    %c0_i32_0 = arith.constant 0 : i32
    %c0_i32_1 = arith.constant 0 : i32
    return %arg0, %c0_i32, %c0_i32_0 : i32, i32, i32
  }
}

</mosaic_0001>

<llo_original>
// kernel: tpu_custom_call.1
$region0: #{tpu_custom_call.1}
  #allocation0 [shape = 'u32[]', space=smem, size = 0x4, offset = 0x4, fixed_abs, tag = 'smem constant byte address 0x4 - core index']
  #allocation1 [shape = 'u32[72,128]{1,0:T(1,128)}', space=vmem, size = 0x9000, scoped, tag = 'internal scratch']
  %s0 = inlined_call_operand.hbm [shape: bf16[2,8,32], index: 0, kind: input, shape index: {}]
  %s1 = inlined_call_operand.hbm [shape: bf16[32,96], index: 1, kind: input, shape index: {}]
  %s2 = inlined_call_operand.hbm [shape: f32[32,32], index: 2, kind: input, shape index: {}]
  %s3 = inlined_call_operand.vmem [shape: f32[1,32], index: 3, kind: input, shape index: {}]
  %s4 = inlined_call_operand.hbm [shape: f32[8,8], index: 4, kind: input, shape index: {}]
  %s5 = inlined_call_operand.hbm [shape: f32[2,8,32], index: 5, kind: output, shape index: {}]
  %s6 = sld [smem:[#allocation0]]
  $region69: #{tpu_custom_call.1} parent=0
    _
  %s8 = ssub.s32 1, %s6
  %s9 = scalar_select 0, %s8, %s6
  $region1: #{tpu_custom_call.1} parent=0
    #allocation2 [shape = 'u8[4096]{0}', space=vmem, size = 0x1000, scoped, tag = 'input window, operand 0']
    #allocation3 [shape = 's32[2]{0}', space=sflag, size = 0x8, scoped, tag = 'scoped memory for tpu_custom_call.1']
    #allocation4 [shape = 's32[2]{0}', space=sflag, size = 0x8, scoped, tag = 'scoped memory for tpu_custom_call.1']
    #allocation5 [shape = 'u8[8192]{0}', space=vmem, size = 0x2000, scoped, tag = 'input window, operand 1, single buffered']
    #allocation6 [shape = 's32[1]{0}', space=sflag, size = 0x4, scoped, tag = 'scoped memory for tpu_custom_call.1']
    #allocation7 [shape = 'u8[16384]{0}', space=vmem, size = 0x4000, scoped, tag = 'input window, operand 2, single buffered']
    #allocation8 [shape = 'u8[4096]{0}', space=vmem, size = 0x1000, scoped, tag = 'input window, operand 4, single buffered']
    #allocation9 [shape = 's32[1]{0}', space=sflag, size = 0x4, scoped, tag = 'scoped memory for tpu_custom_call.1']
    #allocation10 [shape = 'u8[8192]{0}', space=vmem, size = 0x2000, scoped, tag = 'output window, operand 0']
    %10 = vsyncpa [#allocation3], 0
    %s11 = scalar_lea.sflag [#allocation3], 1
    %12 = vsyncpa %s11, 0
    %13 = vsyncpa [#allocation6], 0
    %14 = vsyncpa [#allocation9], 0
    %15 = vsyncpa [#allocation4], 0
    %s16 = scalar_lea.sflag [#allocation4], 1
    %17 = vsyncpa %s16, 0
    loop: start=0, step=1, limit=4
    $region2: #{tpu_custom_call.1} parent=1 // loop_pre_header
      _
    $region3: #{tpu_custom_call.1} parent=1 // loop_header
      %s19 = sphi 0, %s23
      %p20 = scmp.ge.s32.totalorder %s19, 4
      %s29 = sphi 0, %s31
      %s32 = sphi 0, %s29
      %s33 = sphi 0, %s32
      %s49 = sphi 0, %s33
      %s53 = sphi 0, %s53
      %s55 = sphi 0, %s53
      %s56 = sphi 0, %s55
      %s70 = sphi 0, %s56
      %s74 = sphi 0, %s74
      %s76 = sphi 0, %s74
      %s77 = sphi 0, %s76
      %s91 = sphi 0, %s77
      %s95 = sphi 0, %s95
      %s97 = sphi 0, %s95
      %s98 = sphi 0, %s97
      %s112 = sphi 0, %s98
      %s116 = sphi 0, %s116
      %s118 = sphi 0, %s116
      %s119 = sphi 0, %s118
      %s133 = sphi 0, %s119
      %s139 = sphi 0, %s141
      %s142 = sphi 0, %s139
      %s143 = sphi 0, %s142
      %s159 = sphi 0, %s143
    $region4: #{tpu_custom_call.1} parent=1 // loop_header_branch
      %22 = sbr.rel (%p20) target = $region8
    $region5: #{tpu_custom_call.1} parent=1 // loop_body
      %s24 = ssub.s32 %s19, 1
      %s25 = ssub.s32 %s19, 2
      %s26 = sadd.s32 %s19, 1
      %s27 = ssub.s32 %s19, %s26
      %p28 = scmp.eq.s32.totalorder %s27, 0
      %s30 = sadd.s32 %s29, 1
      %s31 = scalar_select %p28, %s29, %s30
      %p34 = pneg %p28
      %p35 = scmp.eq.s32.totalorder %s19, 1
      %p36 = por %p34, %p35
      %p37 = scmp.ne.s32.totalorder %s29, %s32
      %p38 = scmp.eq.s32.totalorder %s19, 0
      %p39 = por %p37, %p38
      %p40 = scmp.ne.s32.totalorder %s29, %s32
      %p41 = scmp.eq.s32.totalorder %s24, 1
      %p42 = por %p40, %p41
      %p43 = scmp.ne.s32.totalorder %s32, %s33
      %p44 = scmp.eq.s32.totalorder %s24, 0
      %p45 = por %p43, %p44
      %p46 = scmp.ne.s32.totalorder %s32, %s33
      %p47 = scmp.eq.s32.totalorder %s25, 1
      %p48 = por %p46, %p47
      %p50 = scmp.ne.s32.totalorder %s33, %s49
      %p51 = scmp.eq.s32.totalorder %s25, 0
      %p52 = por %p50, %p51
      %s54 = sadd.s32 %s53, 1
      %p57 = scmp.eq.s32.totalorder %s19, 1
      %p58 = scmp.ne.s32.totalorder %s53, %s55
      %p59 = scmp.eq.s32.totalorder %s19, 0
      %p60 = por %p58, %p59
      %p61 = scmp.ne.s32.totalorder %s53, %s55
      %p62 = scmp.eq.s32.totalorder %s24, 1
      %p63 = por %p61, %p62
      %p64 = scmp.ne.s32.totalorder %s55, %s56
      %p65 = scmp.eq.s32.totalorder %s24, 0
      %p66 = por %p64, %p65
      %p67 = scmp.ne.s32.totalorder %s55, %s56
      %p68 = scmp.eq.s32.totalorder %s25, 1
      %p69 = por %p67, %p68
      %p71 = scmp.ne.s32.totalorder %s56, %s70
      %p72 = scmp.eq.s32.totalorder %s25, 0
      %p73 = por %p71, %p72
      %s75 = sadd.s32 %s74, 1
      %p78 = scmp.eq.s32.totalorder %s19, 1
      %p79 = scmp.ne.s32.totalorder %s74, %s76
      %p80 = scmp.eq.s32.totalorder %s19, 0
      %p81 = por %p79, %p80
      %p82 = scmp.ne.s32.totalorder %s74, %s76
      %p83 = scmp.eq.s32.totalorder %s24, 1
      %p84 = por %p82, %p83
      %p85 = scmp.ne.s32.totalorder %s76, %s77
      %p86 = scmp.eq.s32.totalorder %s24, 0
      %p87 = por %p85, %p86
      %p88 = scmp.ne.s32.totalorder %s76, %s77
      %p89 = scmp.eq.s32.totalorder %s25, 1
      %p90 = por %p88, %p89
      %p92 = scmp.ne.s32.totalorder %s77, %s91
      %p93 = scmp.eq.s32.totalorder %s25, 0
      %p94 = por %p92, %p93
      %s96 = sadd.s32 %s95, 1
      %p99 = scmp.eq.s32.totalorder %s19, 1
      %p100 = scmp.ne.s32.totalorder %s95, %s97
      %p101 = scmp.eq.s32.totalorder %s19, 0
      %p102 = por %p100, %p101
      %p103 = scmp.ne.s32.totalorder %s95, %s97
      %p104 = scmp.eq.s32.totalorder %s24, 1
      %p105 = por %p103, %p104
      %p106 = scmp.ne.s32.totalorder %s97, %s98
      %p107 = scmp.eq.s32.totalorder %s24, 0
      %p108 = por %p106, %p107
      %p109 = scmp.ne.s32.totalorder %s97, %s98
      %p110 = scmp.eq.s32.totalorder %s25, 1
      %p111 = por %p109, %p110
      %p113 = scmp.ne.s32.totalorder %s98, %s112
      %p114 = scmp.eq.s32.totalorder %s25, 0
      %p115 = por %p113, %p114
      %s117 = sadd.s32 %s116, 1
      %p120 = scmp.eq.s32.totalorder %s19, 1
      %p121 = scmp.ne.s32.totalorder %s116, %s118
      %p122 = scmp.eq.s32.totalorder %s19, 0
      %p123 = por %p121, %p122
      %p124 = scmp.ne.s32.totalorder %s116, %s118
      %p125 = scmp.eq.s32.totalorder %s24, 1
      %p126 = por %p124, %p125
      %p127 = scmp.ne.s32.totalorder %s118, %s119
      %p128 = scmp.eq.s32.totalorder %s24, 0
      %p129 = por %p127, %p128
      %p130 = scmp.ne.s32.totalorder %s118, %s119
      %p131 = scmp.eq.s32.totalorder %s25, 1
      %p132 = por %p130, %p131
      %p134 = scmp.ne.s32.totalorder %s119, %s133
      %p135 = scmp.eq.s32.totalorder %s25, 0
      %p136 = por %p134, %p135
      %s137 = ssub.s32 %s19, %s26
      %p138 = scmp.eq.s32.totalorder %s137, 0
      %s140 = sadd.s32 %s139, 1
      %s141 = scalar_select %p138, %s139, %s140
      %p144 = pneg %p138
      %p145 = scmp.eq.s32.totalorder %s19, 1
      %p146 = por %p144, %p145
      %p147 = scmp.ne.s32.totalorder %s139, %s142
      %p148 = scmp.eq.s32.totalorder %s19, 0
      %p149 = por %p147, %p148
      %p150 = scmp.ne.s32.totalorder %s139, %s142
      %p151 = scmp.eq.s32.totalorder %s24, 1
      %p152 = por %p150, %p151
      %p153 = scmp.ne.s32.totalorder %s142, %s143
      %p154 = scmp.eq.s32.totalorder %s24, 0
      %p155 = por %p153, %p154
      %p156 = scmp.ne.s32.totalorder %s142, %s143
      %p157 = scmp.eq.s32.totalorder %s25, 1
      %p158 = por %p156, %p157
      %p160 = scmp.ne.s32.totalorder %s143, %s159
      %p161 = scmp.eq.s32.totalorder %s25, 0
      %p162 = por %p160, %p161
      %p163 = scmp.le.s32.totalorder 1, %s19
      %p164 = scmp.lt.s32.totalorder %s19, 3
      %p165 = pnand %p163, %p164
      %p166 = pneg %p165
      // Predicated region
      $region9: #{tpu_custom_call.1} parent=5 // pred_check
        _
      $region10: #{tpu_custom_call.1} parent=5 // pred_check_branch
        %168 = sbr.rel (%p165) target = $region12
      $region11: #{tpu_custom_call.1} parent=5 // pred_region
        %s169 = ssub.s32 %s19, 1
        // Predicated region
        $region13: #{tpu_custom_call.1} parent=11 // pred_check
          %p170 = pneg %p66
        $region14: #{tpu_custom_call.1} parent=11 // pred_check_branch
          %172 = sbr.rel (%p170) target = $region16
        $region15: #{tpu_custom_call.1} parent=11 // pred_region
          %174 = vsyncadd [#allocation6], 0
          %s175 = sshll.u32 %s1, 4
          %s176 = int_to_ptr.hbm [resolvable:$true] %s175
          %s177 = sshll.u32 [#allocation5], 4
          %s178 = int_to_ptr.vmem [resolvable:$true] %s177
          %183 = dma.hbm_to_vmem [thread:$0]  %s176, 256, %s178, [#allocation6], 64, 64, 4
        $region16: #{tpu_custom_call.1} parent=11 // pred_fallthru
          _
        // Predicated region
        $region17: #{tpu_custom_call.1} parent=11 // pred_check
          %p184 = pneg %p87
        $region18: #{tpu_custom_call.1} parent=11 // pred_check_branch
          %186 = sbr.rel (%p184) target = $region20
        $region19: #{tpu_custom_call.1} parent=11 // pred_region
          %188 = vsyncadd [#allocation6], 0
          %s189 = sshll.u32 %s2, 4
          %s190 = int_to_ptr.hbm [resolvable:$true] %s189
          %s191 = sshll.u32 [#allocation7], 4
          %s192 = int_to_ptr.vmem [resolvable:$true] %s191
          %197 = dma.hbm_to_vmem [thread:$0]  %s190, 512, %s192, [#allocation6], 128, 128, 8
        $region20: #{tpu_custom_call.1} parent=11 // pred_fallthru
          _
        // Predicated region
        $region21: #{tpu_custom_call.1} parent=11 // pred_check
          %p198 = pneg %p108
        $region22: #{tpu_custom_call.1} parent=11 // pred_check_branch
          %200 = sbr.rel (%p198) target = $region24
        $region23: #{tpu_custom_call.1} parent=11 // pred_region
          _
        $region24: #{tpu_custom_call.1} parent=11 // pred_fallthru
          _
        // Predicated region
        $region25: #{tpu_custom_call.1} parent=11 // pred_check
          %p201 = pneg %p129
        $region26: #{tpu_custom_call.1} parent=11 // pred_check_branch
          %203 = sbr.rel (%p201) target = $region28
        $region27: #{tpu_custom_call.1} parent=11 // pred_region
          %205 = vsyncadd [#allocation9], 0
          %s207 = sshll.u32 %s4, 4
          %s208 = int_to_ptr.hbm [resolvable:$true] %s207
          %s209 = sshll.u32 [#allocation8], 4
          %s210 = int_to_ptr.vmem [resolvable:$true] %s209
          %212 = dma.hbm_to_vmem [thread:$0]  %s208, 128, %s210, [#allocation9]
        $region28: #{tpu_custom_call.1} parent=11 // pred_fallthru
          _
      $region12: #{tpu_custom_call.1} parent=5 // pred_fallthru
        _
      %p213 = scmp.lt.s32.totalorder %s19, 2
      // Predicated region
      $region29: #{tpu_custom_call.1} parent=5 // pred_check
        %p214 = pneg %p213
      $region30: #{tpu_custom_call.1} parent=5 // pred_check_branch
        %216 = sbr.rel (%p214) target = $region32
      $region31: #{tpu_custom_call.1} parent=5 // pred_region
        // Predicated region
        $region33: #{tpu_custom_call.1} parent=31 // pred_check
          %p217 = pneg %p39
        $region34: #{tpu_custom_call.1} parent=31 // pred_check_branch
          %219 = sbr.rel (%p217) target = $region36
        $region35: #{tpu_custom_call.1} parent=31 // pred_region
          %s220 = sand.u32 %s29, 1
          %s221 = scalar_lea.sflag [#allocation3], %s220
          %s222 = sand.u32 %s29, 1
          %s223 = smul.addr %s222, 4
          %s224 = scalar_lea.vmem [#allocation2], %s223
          %226 = vsyncadd %s221, 0
          %s227 = smul.addr %s19, 4
          %s228 = scalar_lea.hbm %s0, %s227
          %s230 = sshll.u32 %s228, 4
          %s231 = int_to_ptr.hbm [resolvable:$true] %s230
          %s232 = sshll.u32 %s224, 4
          %s233 = int_to_ptr.vmem [resolvable:$true] %s232
          %235 = dma.hbm_to_vmem [thread:$0]  %s231, 64, %s233, %s221
        $region36: #{tpu_custom_call.1} parent=31 // pred_fallthru
          _
      $region32: #{tpu_custom_call.1} parent=5 // pred_fallthru
        _
      %p236 = scmp.le.s32.totalorder 1, %s19
      %p237 = scmp.lt.s32.totalorder %s19, 3
      %p238 = pnand %p236, %p237
      %p239 = pneg %p238
      // Predicated region
      $region37: #{tpu_custom_call.1} parent=5 // pred_check
        _
      $region38: #{tpu_custom_call.1} parent=5 // pred_check_branch
        %241 = sbr.rel (%p238) target = $region40
      $region39: #{tpu_custom_call.1} parent=5 // pred_region
        %s242 = ssub.s32 %s19, 1
        %s243 = sand.u32 %s32, 1
        %s244 = scalar_lea.sflag [#allocation3], %s243
        %s245 = sand.u32 %s32, 1
        %s246 = smul.addr %s245, 4
        %s247 = scalar_lea.vmem [#allocation2], %s246
        // Predicated region
        $region41: #{tpu_custom_call.1} parent=39 // pred_check
          %p248 = pneg %p45
        $region42: #{tpu_custom_call.1} parent=39 // pred_check_branch
          %250 = sbr.rel (%p248) target = $region44
        $region43: #{tpu_custom_call.1} parent=39 // pred_region
          %252 = dma.done %s244, 64
        $region44: #{tpu_custom_call.1} parent=39 // pred_fallthru
          _
        // Predicated region
        $region45: #{tpu_custom_call.1} parent=39 // pred_check
          %p253 = pneg %p66
        $region46: #{tpu_custom_call.1} parent=39 // pred_check_branch
          %255 = sbr.rel (%p253) target = $region48
        $region47: #{tpu_custom_call.1} parent=39 // pred_region
          %257 = dma.done [#allocation6], 256
        $region48: #{tpu_custom_call.1} parent=39 // pred_fallthru
          _
        // Predicated region
        $region49: #{tpu_custom_call.1} parent=39 // pred_check
          %p258 = pneg %p87
        $region50: #{tpu_custom_call.1} parent=39 // pred_check_branch
          %260 = sbr.rel (%p258) target = $region52
        $region51: #{tpu_custom_call.1} parent=39 // pred_region
          %262 = dma.done [#allocation6], 512
        $region52: #{tpu_custom_call.1} parent=39 // pred_fallthru
          _
        // Predicated region
        $region53: #{tpu_custom_call.1} parent=39 // pred_check
          %p263 = pneg %p129
        $region54: #{tpu_custom_call.1} parent=39 // pred_check_branch
          %265 = sbr.rel (%p263) target = $region56
        $region55: #{tpu_custom_call.1} parent=39 // pred_region
          %267 = dma.done [#allocation9], 128
        $region56: #{tpu_custom_call.1} parent=39 // pred_fallthru
          _
        %s268 = sand.u32 %s32, 1
        %s269 = scalar_lea.sflag [#allocation3], %s268
        %s270 = sand.u32 %s32, 1
        %s271 = smul.addr %s270, 4
        %s272 = scalar_lea.vmem [#allocation2], %s271
        %p273 = pneg %p45
        %p274 = pneg %p42
        %p275 = pneg %p66
        %p276 = pneg %p63
        %p277 = pneg %p87
        %p278 = pneg %p84
        %p279 = pneg %p108
        %p280 = pneg %p105
        %p281 = pneg %p129
        %p282 = pneg %p126
        %p283 = pneg %p155
        %p284 = pneg %p152
        %s285 = sand.u32 %s142, 1
        %s286 = scalar_lea.sflag [#allocation4], %s285
        %s287 = sand.u32 %s142, 1
        %s288 = smul.addr %s287, 8
        %s289 = scalar_lea.vmem [#allocation10], %s288
        %v291 = vld [vmem:[%s247] sm:$0xf]
        %v292 = vld [vmem:[#allocation5] sm:$0xf]
        %v293 = vld [vmem:[#allocation5 + $0x4] sm:$0xf]
        %v294 = vld [vmem:[#allocation5 + $0x8] sm:$0xf]
        %v295 = vld [vmem:[#allocation5 + $0xc] sm:$0xf]
        %v296 = vld [vmem:[#allocation7] sm:$0xff]
        %v297 = vld [vmem:[#allocation7 + $0x8] sm:$0xff]
        %v298 = vld [vmem:[#allocation7 + $0x10] sm:$0xff]
        %v299 = vld [vmem:[#allocation7 + $0x18] sm:$0xff]
        %v300 = vld [vmem:[#allocation8] sm:$0xff]
        %v305 = vunpack.c.l.b16 %v292
        %v306 = vunpack.c.l.b16 %v293
        %v307 = vunpack.c.l.b16 %v294
        %v308 = vunpack.c.l.b16 %v295
        %v309 = vpack.c.b16 %v306, %v305
        %v310 = vpack.c.b16 %v308, %v307
        %vm313 = vcmask 261120
        %v315 = vsel %vm313, %v291, 0
        %317 = vmatpush.bf16.msra.mxu0 0
        %318 = vmatpush.bf16.msra.mxu0 0
        %319 = vmatpush.bf16.msra.mxu0 0
        %320 = vmatpush.bf16.msra.mxu0 0
        %321 = vmatpush.bf16.msra.mxu0 0
        %322 = vmatpush.bf16.msra.mxu0 0
        %323 = vmatpush.bf16.msra.mxu0 %v310
        %324 = vmatpush.bf16.msra.mxu0 %v309
        %325 = vmatmul.bf16.gmra.mxu0 %v315
        %v326 = vpop.f32.mrf.mxu0
        %v327 = vadd.f32 0.0, %v326
        %v328 = vpop.f32.mrf.mxu0
        %329 = vdwg.mxu0
        %v330 = vmul.f32 %v327, 0.25
        %332 = vrot.lane.b32.xlu0 %v327, 96
        %v333 = vpop.permute.xlu0 %332
        %vm334 = vcmask 130048
        %v336 = vsel %vm334, %v330, 0
        %v338 = vsel %vm334, %v333, 0
        %340 = vmatpush.xpose.msra.mxu0 0.0
        %341 = vmatpush.xpose.msra.mxu0 0.0
        %342 = vmatpush.xpose.msra.mxu0 0.0
        %343 = vmatpush.xpose.msra.mxu0 0.0
        %344 = vmatpush.xpose.msra.mxu0 0.0
        %345 = vmatpush.xpose.msra.mxu0 0.0
        %346 = vmatpush.xpose.msra.mxu0 0.0
        %347 = vmatpush.xpose.msra.mxu0 0.0
        %348 = vmatpush.xpose.msra.mxu0 0.0
        %349 = vmatpush.xpose.msra.mxu0 0.0
        %350 = vmatpush.xpose.msra.mxu0 0.0
        %351 = vmatpush.xpose.msra.mxu0 0.0
        %352 = vmatpush.xpose.msra.mxu0 0.0
        %353 = vmatpush.xpose.msra.mxu0 0.0
        %354 = vmatpush.xpose.msra.mxu0 0.0
        %355 = vmatpush.xpose.msra.mxu0 %v338
        %356 = vmatmul.f32.gmra.mxu0 %v336
        %v357 = vpop.f32.mrf.mxu0
        %v358 = vadd.f32 %v300, %v357
        %359 = vdwg.mxu0
        %vm360 = vcmask 64512
        %v361 = vsel %vm360, %v358, -inf
        %362 = vmax.xlane.f32.xlu0 %v361
        %v363 = vpop.xlane.xlu0 %362
        %v364 = vsub.f32 %v358, %v363
        %v365 = vmul.f32 %v364, 1.442695
        %v366 = vpow.pop %v365
        %v367 = vsel %vm360, %v366, 0.0
        %368 = vadd.xlane.f32.xlu0 %v367
        %v369 = vpop.xlane.xlu0 %368
        %v370 = vrcp.pop %v369
        %v371 = vmul.f32 %v366, %v370
        %372 = vrot.lane.b32.xlu0 %v327, 64
        %v373 = vpop.permute.xlu0 %372
        %v376 = vsel %vm360, %v371, 0
        %378 = vmatpush.msra.mxu0 0.0
        %379 = vmatpush.msra.mxu0 0.0
        %380 = vmatpush.msra.mxu0 0.0
        %381 = vmatpush.msra.mxu0 0.0
        %382 = vmatpush.msra.mxu0 0.0
        %383 = vmatpush.msra.mxu0 0.0
        %384 = vmatpush.msra.mxu0 0.0
        %385 = vmatpush.msra.mxu0 0.0
        %386 = vmatpush.msra.mxu0 0.0
        %387 = vmatpush.msra.mxu0 0.0
        %388 = vmatpush.msra.mxu0 0.0
        %389 = vmatpush.msra.mxu0 0.0
        %390 = vmatpush.msra.mxu0 0.0
        %391 = vmatpush.msra.mxu0 0.0
        %392 = vmatpush.msra.mxu0 0.0
        %393 = vmatpush.msra.mxu0 %v373
        %394 = vmatmul.f32.gmra.mxu0 %v376
        %v395 = vpop.f32.mrf.mxu0
        %v396 = vadd.f32 0.0, %v395
        %397 = vdwg.mxu0
        %398 = vrot.lane.b32.xlu0 %v330, 112
        %v399 = vpop.permute.xlu0 %398
        %400 = vrot.lane.b32.xlu0 %v327, 80
        %v401 = vpop.permute.xlu0 %400
        %v402 = vsel %vm334, %v399, 0
        %v404 = vsel %vm334, %v401, 0
        %406 = vmatpush.xpose.msra.mxu0 0.0
        %407 = vmatpush.xpose.msra.mxu0 0.0
        %408 = vmatpush.xpose.msra.mxu0 0.0
        %409 = vmatpush.xpose.msra.mxu0 0.0
        %410 = vmatpush.xpose.msra.mxu0 0.0
        %411 = vmatpush.xpose.msra.mxu0 0.0
        %412 = vmatpush.xpose.msra.mxu0 0.0
        %413 = vmatpush.xpose.msra.mxu0 0.0
        %414 = vmatpush.xpose.msra.mxu0 0.0
        %415 = vmatpush.xpose.msra.mxu0 0.0
        %416 = vmatpush.xpose.msra.mxu0 0.0
        %417 = vmatpush.xpose.msra.mxu0 0.0
        %418 = vmatpush.xpose.msra.mxu0 0.0
        %419 = vmatpush.xpose.msra.mxu0 0.0
        %420 = vmatpush.xpose.msra.mxu0 0.0
        %421 = vmatpush.xpose.msra.mxu0 %v404
        %422 = vmatmul.f32.gmra.mxu0 %v402
        %v423 = vpop.f32.mrf.mxu0
        %v424 = vadd.f32 %v300, %v423
        %425 = vdwg.mxu0
        %v426 = vsel %vm360, %v424, -inf
        %427 = vmax.xlane.f32.xlu0 %v426
        %v428 = vpop.xlane.xlu0 %427
        %v429 = vsub.f32 %v424, %v428
        %v430 = vmul.f32 %v429, 1.442695
        %v431 = vpow.pop %v430
        %v432 = vsel %vm360, %v431, 0.0
        %433 = vadd.xlane.f32.xlu0 %v432
        %v434 = vpop.xlane.xlu0 %433
        %v435 = vrcp.pop %v434
        %v436 = vmul.f32 %v431, %v435
        %437 = vrot.lane.b32.xlu0 %v327, 48
        %v438 = vpop.permute.xlu0 %437
        %v441 = vsel %vm360, %v436, 0
        %443 = vmatpush.msra.mxu0 0.0
        %444 = vmatpush.msra.mxu0 0.0
        %445 = vmatpush.msra.mxu0 0.0
        %446 = vmatpush.msra.mxu0 0.0
        %447 = vmatpush.msra.mxu0 0.0
        %448 = vmatpush.msra.mxu0 0.0
        %449 = vmatpush.msra.mxu0 0.0
        %450 = vmatpush.msra.mxu0 0.0
        %451 = vmatpush.msra.mxu0 0.0
        %452 = vmatpush.msra.mxu0 0.0
        %453 = vmatpush.msra.mxu0 0.0
        %454 = vmatpush.msra.mxu0 0.0
        %455 = vmatpush.msra.mxu0 0.0
        %456 = vmatpush.msra.mxu0 0.0
        %457 = vmatpush.msra.mxu0 0.0
        %458 = vmatpush.msra.mxu0 %v438
        %459 = vmatmul.f32.gmra.mxu0 %v441
        %v460 = vpop.f32.mrf.mxu0
        %v461 = vadd.f32 0.0, %v460
        %462 = vdwg.mxu0
        %v464 = vsel %vm334, %v461, 0
        %466 = vmatpush.msra.mxu0 0.0
        %467 = vmatpush.msra.mxu0 0.0
        %468 = vmatpush.msra.mxu0 0.0
        %469 = vmatpush.msra.mxu0 0.0
        %470 = vmatpush.msra.mxu0 0.0
        %471 = vmatpush.msra.mxu0 0.0
        %472 = vmatpush.msra.mxu0 0.0
        %473 = vmatpush.msra.mxu0 0.0
        %474 = vmatpush.msra.mxu0 0.0
        %475 = vmatpush.msra.mxu0 0.0
        %476 = vmatpush.msra.mxu0 0.0
        %477 = vmatpush.msra.mxu0 0.0
        %478 = vmatpush.msra.mxu0 0.0
        %479 = vmatpush.msra.mxu0 0.0
        %480 = vmatpush.msra.mxu0 %v299
        %481 = vmatpush.msra.mxu0 %v298
        %482 = vmatmul.f32.gmra.mxu0 %v464
        %v483 = vpop.f32.mrf.mxu0
        %v484 = vadd.f32 0.0, %v483
        %485 = vdwg.mxu0
        %v487 = vsel %vm334, %v396, 0
        %489 = vmatpush.msra.mxu0 0.0
        %490 = vmatpush.msra.mxu0 0.0
        %491 = vmatpush.msra.mxu0 0.0
        %492 = vmatpush.msra.mxu0 0.0
        %493 = vmatpush.msra.mxu0 0.0
        %494 = vmatpush.msra.mxu0 0.0
        %495 = vmatpush.msra.mxu0 0.0
        %496 = vmatpush.msra.mxu0 0.0
        %497 = vmatpush.msra.mxu0 0.0
        %498 = vmatpush.msra.mxu0 0.0
        %499 = vmatpush.msra.mxu0 0.0
        %500 = vmatpush.msra.mxu0 0.0
        %501 = vmatpush.msra.mxu0 0.0
        %502 = vmatpush.msra.mxu0 0.0
        %503 = vmatpush.msra.mxu0 %v297
        %504 = vmatpush.msra.mxu0 %v296
        %505 = vmatmul.f32.gmra.mxu0 %v487
        %v506 = vpop.f32.mrf.mxu0
        %v507 = vadd.f32 %v484, %v506
        %508 = vdwg.mxu0
        %v509 = vld [vmem:[%s3] sm:$0x1]
        %v511 = vperm.slane %v509, 0
        %v513 = vadd.f32 %v507, %v511
        %514 = vst.msk [vmem:[%s289] sm:$0xff] %vm313, %v513
        %s515 = sand.u32 %s142, 1
        %s516 = scalar_lea.sflag [#allocation4], %s515
        %s517 = sand.u32 %s142, 1
        %s518 = smul.addr %s517, 8
        %s519 = scalar_lea.vmem [#allocation10], %s518
        // Predicated region
        $region57: #{tpu_custom_call.1} parent=39 // pred_check
          %p520 = pneg %p152
        $region58: #{tpu_custom_call.1} parent=39 // pred_check_branch
          %522 = sbr.rel (%p520) target = $region60
        $region59: #{tpu_custom_call.1} parent=39 // pred_region
          %524 = vsyncadd %s516, 0
          %s525 = smul.addr %s24, 8
          %s526 = scalar_lea.hbm %s5, %s525
          %s528 = sshll.u32 %s519, 4
          %s529 = int_to_ptr.vmem [resolvable:$true] %s528
          %s530 = sshll.u32 %s526, 4
          %s531 = int_to_ptr.hbm [resolvable:$true] %s530
          %533 = dma.vmem_to_hbm [thread:$0]  %s529, 128, %s531, %s516
        $region60: #{tpu_custom_call.1} parent=39 // pred_fallthru
          _
      $region40: #{tpu_custom_call.1} parent=5 // pred_fallthru
        _
      %p534 = scmp.le.s32.totalorder 2, %s19
      // Predicated region
      $region61: #{tpu_custom_call.1} parent=5 // pred_check
        %p535 = pneg %p534
      $region62: #{tpu_custom_call.1} parent=5 // pred_check_branch
        %537 = sbr.rel (%p535) target = $region64
      $region63: #{tpu_custom_call.1} parent=5 // pred_region
        %s538 = ssub.s32 %s19, 2
        // Predicated region
        $region65: #{tpu_custom_call.1} parent=63 // pred_check
          %p539 = pneg %p158
        $region66: #{tpu_custom_call.1} parent=63 // pred_check_branch
          %541 = sbr.rel (%p539) target = $region68
        $region67: #{tpu_custom_call.1} parent=63 // pred_region
          %s542 = sand.u32 %s143, 1
          %s543 = scalar_lea.sflag [#allocation4], %s542
          %s544 = sand.u32 %s143, 1
          %s545 = smul.addr %s544, 8
          %s546 = scalar_lea.vmem [#allocation10], %s545
          %548 = dma.done %s543, 128
        $region68: #{tpu_custom_call.1} parent=63 // pred_fallthru
          _
      $region64: #{tpu_custom_call.1} parent=5 // pred_fallthru
        _
    $region6: #{tpu_custom_call.1} parent=1 // loop_footer
      %s23 = sadd.s32 1, %s19
    $region7: #{tpu_custom_call.1} parent=1 // loop_footer_branch
      %18 = sbr.rel target = $region3
    $region8: #{tpu_custom_call.1} parent=1 // loop_exit
      _
    %549 = vsyncpa [#allocation3], 1
    %s550 = scalar_lea.sflag [#allocation3], 1
    %551 = vsyncpa %s550, 1
    %552 = vsyncpa [#allocation6], 1
    %553 = vsyncpa [#allocation9], 1
    %554 = vsyncpa [#allocation4], 1
    %s555 = scalar_lea.sflag [#allocation4], 1
    %556 = vsyncpa %s555, 1

</llo_original>
